<compile_context>
chip_gen: v6e
topology: v6e:2x2x1
jax: 0.10.0
libtpu: 0.0.40
codegen_flags: <defaults>
</compile_context>

<pallas_src>
import functools

import jax
import jax.numpy as jnp
from jax.experimental import pallas as pl
from jax.experimental.pallas import tpu as pltpu


def _make_multinet_kernel(num_layers):
    """Build a kernel for an ensemble MLP with `num_layers` fused layers.

    Kernel ref layout: (x, w_0, b_0, ..., w_{L-1}, b_{L-1}, out)
      x    : (B, D_in)
      w_0  : (D_in, N*d_1)            -- per-net W, concatenated along columns
      w_l  : (N*d_l, N*d_{l+1})       -- block-diagonal per-net W  (l >= 1)
      b_l  : (1, N*d_{l+1})
      out  : (B, N*d_L)               -- PyTorch column-concat layout
    """

    def kernel(x_ref, *refs):
        o_ref = refs[-1]
        h = x_ref[...]
        for l in range(num_layers):
            w = refs[2 * l][...]
            b = refs[2 * l + 1][...]
            h = jnp.dot(h, w, preferred_element_type=jnp.float32) + b
            if l < num_layers - 1:          # act_f[hidden] = ReLU
                h = jnp.maximum(h, 0.0)
            # act_f[last] = identity
        o_ref[...] = h.astype(o_ref.dtype)  # one lane-dense full-width store

    return kernel


def _block_diag(w):
    """(N, a, b) per-net weights -> (N*a, N*b) block-diagonal fused weight."""
    N, a, b = w.shape
    eye = jnp.eye(N, dtype=w.dtype)
    # out[n*a + i, m*b + j] = w[n, i, j] if n == m else 0
    return (eye[:, None, :, None] * w[:, :, None, :]).reshape(N * a, N * b)


def _pack_params(weights, biases):
    """Pack per-net parameters into fused layouts for the kernel.

    weights: list over layers, weights[l] has shape (N, d_l, d_{l+1})
             (nn.Linear weights pre-transposed to (in, out)).
    biases : list over layers, biases[l] has shape (N, d_{l+1}).
    """
    packed = []
    for l, (w, b) in enumerate(zip(weights, biases)):
        N, d_in, d_out = w.shape
        if l == 0:
            # Concat along the output (lane) axis: net n -> cols [n*d_out:(n+1)*d_out].
            w_f = jnp.transpose(w, (1, 0, 2)).reshape(d_in, N * d_out)
        else:
            # Block diagonal so net n's activations only feed net n's outputs.
            w_f = _block_diag(w)
        b_f = b.reshape(1, N * d_out)
        packed.append(w_f)
        packed.append(b_f)
    return packed


@jax.jit
def multi_network_forward(x, weights, biases):
    """x: (B, D_in); weights[l]: (N, d_l, d_{l+1}); biases[l]: (N, d_{l+1}).
    Returns (B, N * d_last), matching the PyTorch column-concat layout."""
    B = x.shape[0]
    num_layers = len(weights)
    N = weights[0].shape[0]
    d_last = weights[-1].shape[-1]

    packed = _pack_params(weights, biases)

    vmem = pl.BlockSpec(memory_space=pltpu.MemorySpace.VMEM)
    return pl.pallas_call(
        _make_multinet_kernel(num_layers),
        out_shape=jax.ShapeDtypeStruct((B, N * d_last), x.dtype),
        in_specs=[vmem] * (1 + 2 * num_layers),
        out_specs=vmem,
    )(x, *packed)


def _reference(x, weights, biases):
    """Pure-JAX reference mirroring the PyTorch forward loop."""
    N = weights[0].shape[0]
    L = len(weights)
    outs = []
    for n in range(N):
        h = x
        for l in range(L):
            h = h @ weights[l][n] + biases[l][n][None, :]
            if l < L - 1:
                h = jnp.maximum(h, 0.0)
        outs.append(h)
    return jnp.concatenate(outs, axis=1)


if __name__ == "__main__":
    # Small shapes consistent with the module: nets=3, nodes=[32, 64, 16], batch=8.
    nets = 3
    nodes = [32, 64, 16]
    batch = 8

    key = jax.random.PRNGKey(0)
    keys = jax.random.split(key, 1 + 2 * (len(nodes) - 1))

    x = jax.random.normal(keys[0], (batch, nodes[0]), dtype=jnp.float32)

    # Deterministic synthetic parameters (nn.Linear weights stored pre-transposed
    # to (in, out); biases stored per net).
    weights = []
    biases = []
    for l in range(len(nodes) - 1):
        kw = keys[1 + 2 * l]
        kb = keys[2 + 2 * l]
        weights.append(
            jax.random.normal(kw, (nets, nodes[l], nodes[l + 1]), dtype=jnp.float32) * 0.1
        )
        biases.append(
            jax.random.normal(kb, (nets, nodes[l + 1]), dtype=jnp.float32) * 0.1
        )

    y = multi_network_forward(x, weights, biases)
    y = jax.block_until_ready(y)

    y_ref = _reference(x, weights, biases)
    assert y.shape == (batch, nets * nodes[-1]), y.shape
    assert jnp.allclose(y, y_ref, atol=1e-5, rtol=1e-5), "mismatch vs reference"

    print("KERNEL_OK")
</pallas_src>

<mosaic_0001>
module attributes {stable_mosaic.version = 11 : i64} {
  func.func @kernel(%arg0: memref<8x32xf32, #tpu.memory_space<vmem>>, %arg1: memref<32x192xf32, #tpu.memory_space<vmem>>, %arg2: memref<1x192xf32, #tpu.memory_space<vmem>>, %arg3: memref<192x48xf32, #tpu.memory_space<vmem>>, %arg4: memref<1x48xf32, #tpu.memory_space<vmem>>, %arg5: memref<8x48xf32, #tpu.memory_space<vmem>>) attributes {dimension_semantics = [], scalar_prefetch = 0 : i64, scratch_operands = 0 : i64, tpu.core_type = #tpu.core_type<tc>} {
    %c0 = arith.constant 0 : index
    %c0_0 = arith.constant 0 : index
    %0 = vector.load %arg0[%c0, %c0_0] : memref<8x32xf32, #tpu.memory_space<vmem>>, vector<8x32xf32>
    %c0_1 = arith.constant 0 : index
    %c0_2 = arith.constant 0 : index
    %1 = vector.load %arg1[%c0_1, %c0_2] : memref<32x192xf32, #tpu.memory_space<vmem>>, vector<32x192xf32>
    %c0_3 = arith.constant 0 : index
    %c0_4 = arith.constant 0 : index
    %2 = vector.load %arg2[%c0_3, %c0_4] : memref<1x192xf32, #tpu.memory_space<vmem>>, vector<1x192xf32>
    %cst = arith.constant dense<0.000000e+00> : vector<8x192xf32>
    %3 = tpu.matmul %0, %1, %cst {dimension_numbers = #tpu.dot_dimension_numbers<[1], [0], [0], [1], [0, 0, 1, 1], [], []>} : vector<8x32xf32>, vector<32x192xf32>, vector<8x192xf32> -> vector<8x192xf32>
    %4 = vector.broadcast %2 : vector<1x192xf32> to vector<8x192xf32>
    %5 = arith.addf %3, %4 : vector<8x192xf32>
    %cst_5 = arith.constant 0.000000e+00 : f32
    %6 = vector.broadcast %cst_5 : f32 to vector<8x192xf32>
    %7 = arith.maximumf %5, %6 : vector<8x192xf32>
    %c0_6 = arith.constant 0 : index
    %c0_7 = arith.constant 0 : index
    %8 = vector.load %arg3[%c0_6, %c0_7] : memref<192x48xf32, #tpu.memory_space<vmem>>, vector<192x48xf32>
    %c0_8 = arith.constant 0 : index
    %c0_9 = arith.constant 0 : index
    %9 = vector.load %arg4[%c0_8, %c0_9] : memref<1x48xf32, #tpu.memory_space<vmem>>, vector<1x48xf32>
    %cst_10 = arith.constant dense<0.000000e+00> : vector<8x48xf32>
    %10 = tpu.matmul %7, %8, %cst_10 {dimension_numbers = #tpu.dot_dimension_numbers<[1], [0], [0], [1], [0, 0, 1, 1], [], []>} : vector<8x192xf32>, vector<192x48xf32>, vector<8x48xf32> -> vector<8x48xf32>
    %11 = vector.broadcast %9 : vector<1x48xf32> to vector<8x48xf32>
    %12 = arith.addf %10, %11 : vector<8x48xf32>
    %c0_11 = arith.constant 0 : index
    %c0_12 = arith.constant 0 : index
    %13 = vector.load %arg5[%c0_11, %c0_12] : memref<8x48xf32, #tpu.memory_space<vmem>>, vector<8x48xf32>
    tpu.vector_store %arg5[%c0_11, %c0_12], %12 {strides = array<i32>} : memref<8x48xf32, #tpu.memory_space<vmem>>, vector<8x48xf32>,
    return
  }
}

</mosaic_0001>

<llo_original>
// kernel: multi_network_forward.1
$region0: #{multi_network_forward.1}
  #allocation0 [shape = 'u32[]', space=smem, size = 0x4, offset = 0x4, fixed_abs, tag = 'smem constant byte address 0x4 - core index']
  #allocation1 [shape = 'u32[144,128]{1,0:T(1,128)}', space=vmem, size = 0x12000, scoped, tag = 'internal scratch']
  %s0 = inlined_call_operand.vmem [shape: f32[8,32], index: 0, kind: input, shape index: {}]
  %s1 = inlined_call_operand.vmem [shape: f32[32,192], index: 1, kind: input, shape index: {}]
  %s2 = inlined_call_operand.vmem [shape: f32[1,192], index: 2, kind: input, shape index: {}]
  %s3 = inlined_call_operand.vmem [shape: f32[192,48], index: 3, kind: input, shape index: {}]
  %s4 = inlined_call_operand.vmem [shape: f32[1,48], index: 4, kind: input, shape index: {}]
  %s5 = inlined_call_operand.hbm [shape: f32[8,48], index: 5, kind: output, shape index: {}]
  %s6 = sld [smem:[#allocation0]]
  $region30: #{multi_network_forward.1} parent=0
    _
  %s8 = ssub.s32 1, %s6
  %s9 = scalar_select 0, %s8, %s6
  $region1: #{multi_network_forward.1} parent=0
    #allocation2 [shape = 'u8[4096]{0}', space=vmem, size = 0x1000, scoped, tag = 'output window, operand 0, single buffered']
    #allocation3 [shape = 's32[1]{0}', space=sflag, size = 0x4, scoped, tag = 'scoped memory for multi_network_forward.1']
    %10 = vsyncpa [#allocation3], 0
    // Predicated region
    $region2: #{multi_network_forward.1} parent=1 // pred_check
      _
    $region3: #{multi_network_forward.1} parent=1 // pred_check_branch
      %12 = sbr.rel (0) target = $region5
    $region4: #{multi_network_forward.1} parent=1 // pred_region
      _
    $region5: #{multi_network_forward.1} parent=1 // pred_fallthru
      _
    // Predicated region
    $region6: #{multi_network_forward.1} parent=1 // pred_check
      _
    $region7: #{multi_network_forward.1} parent=1 // pred_check_branch
      %14 = sbr.rel (0) target = $region9
    $region8: #{multi_network_forward.1} parent=1 // pred_region
      _
    $region9: #{multi_network_forward.1} parent=1 // pred_fallthru
      _
    // Predicated region
    $region10: #{multi_network_forward.1} parent=1 // pred_check
      _
    $region11: #{multi_network_forward.1} parent=1 // pred_check_branch
      %16 = sbr.rel (0) target = $region13
    $region12: #{multi_network_forward.1} parent=1 // pred_region
      _
    $region13: #{multi_network_forward.1} parent=1 // pred_fallthru
      _
    // Predicated region
    $region14: #{multi_network_forward.1} parent=1 // pred_check
      _
    $region15: #{multi_network_forward.1} parent=1 // pred_check_branch
      %18 = sbr.rel (0) target = $region17
    $region16: #{multi_network_forward.1} parent=1 // pred_region
      _
    $region17: #{multi_network_forward.1} parent=1 // pred_fallthru
      _
    // Predicated region
    $region18: #{multi_network_forward.1} parent=1 // pred_check
      _
    $region19: #{multi_network_forward.1} parent=1 // pred_check_branch
      %20 = sbr.rel (0) target = $region21
    $region20: #{multi_network_forward.1} parent=1 // pred_region
      _
    $region21: #{multi_network_forward.1} parent=1 // pred_fallthru
      _
    %v21 = vld [vmem:[%s0] sm:$0xff]
    %v22 = vld [vmem:[%s1] sm:$0xff]
    %v23 = vld [vmem:[%s1 + $0x8] sm:$0xff]
    %v24 = vld [vmem:[%s1 + $0x10] sm:$0xff]
    %v25 = vld [vmem:[%s1 + $0x18] sm:$0xff]
    %v26 = vld [vmem:[%s1 + $0x20] sm:$0xff]
    %v27 = vld [vmem:[%s1 + $0x28] sm:$0xff]
    %v28 = vld [vmem:[%s1 + $0x30] sm:$0xff]
    %v29 = vld [vmem:[%s1 + $0x38] sm:$0xff]
    %v30 = vld [vmem:[%s2] sm:$0x3]
    %v32 = vlaneseq
    %v33 = vshrl.u32 %v32, 7
    %v34 = vsub.s32 0, %v33
    %v35 = vrot.slane %v30, %v34
    %v36 = vlaneseq
    %v37 = vshrl.u32 %v36, 7
    %v38 = vsub.s32 1, %v37
    %v39 = vrot.slane %v30, %v38
    %vm42 = vcmask 261120
    %v44 = vsel %vm42, %v21, 0
    %46 = vmatprep.subr.mxu0 0.0
    %47 = vmatpush1.msra.mxu0 0.0
    %48 = vmatprep.subr.mxu0 0.0
    %49 = vmatpush1.msra.mxu0 0.0
    %50 = vmatprep.subr.mxu0 0.0
    %51 = vmatpush1.msra.mxu0 0.0
    %52 = vmatprep.subr.mxu0 0.0
    %53 = vmatpush1.msra.mxu0 0.0
    %54 = vmatprep.subr.mxu0 0.0
    %55 = vmatpush1.msra.mxu0 0.0
    %56 = vmatprep.subr.mxu0 0.0
    %57 = vmatpush1.msra.mxu0 0.0
    %58 = vmatprep.subr.mxu0 0.0
    %59 = vmatpush1.msra.mxu0 0.0
    %60 = vmatprep.subr.mxu0 0.0
    %61 = vmatpush1.msra.mxu0 0.0
    %62 = vmatprep.subr.mxu0 0.0
    %63 = vmatpush1.msra.mxu0 0.0
    %64 = vmatprep.subr.mxu0 0.0
    %65 = vmatpush1.msra.mxu0 0.0
    %66 = vmatprep.subr.mxu0 0.0
    %67 = vmatpush1.msra.mxu0 0.0
    %68 = vmatprep.subr.mxu0 0.0
    %69 = vmatpush1.msra.mxu0 0.0
    %70 = vmatprep.subr.mxu0 %v29
    %71 = vmatpush1.msra.mxu0 %v28
    %72 = vmatprep.subr.mxu0 %v27
    %73 = vmatpush1.msra.mxu0 %v26
    %74 = vmatprep.subr.mxu0 %v25
    %75 = vmatpush1.msra.mxu0 %v24
    %76 = vmatprep.subr.mxu0 %v23
    %77 = vmatpush1.msra.mxu0 %v22
    %78 = vmatprep.subr.mxu0 0.0
    %79 = vmatpush2.msra.mxu0 0.0
    %80 = vmatprep.subr.mxu0 0.0
    %81 = vmatpush2.msra.mxu0 0.0
    %82 = vmatprep.subr.mxu0 0.0
    %83 = vmatpush2.msra.mxu0 0.0
    %84 = vmatprep.subr.mxu0 0.0
    %85 = vmatpush2.msra.mxu0 0.0
    %86 = vmatprep.subr.mxu0 0.0
    %87 = vmatpush2.msra.mxu0 0.0
    %88 = vmatprep.subr.mxu0 0.0
    %89 = vmatpush2.msra.mxu0 0.0
    %90 = vmatprep.subr.mxu0 0.0
    %91 = vmatpush2.msra.mxu0 0.0
    %92 = vmatprep.subr.mxu0 0.0
    %93 = vmatpush2.msra.mxu0 0.0
    %94 = vmatprep.subr.mxu0 0.0
    %95 = vmatpush2.msra.mxu0 0.0
    %96 = vmatprep.subr.mxu0 0.0
    %97 = vmatpush2.msra.mxu0 0.0
    %98 = vmatprep.subr.mxu0 0.0
    %99 = vmatpush2.msra.mxu0 0.0
    %100 = vmatprep.subr.mxu0 0.0
    %101 = vmatpush2.msra.mxu0 0.0
    %102 = vmatprep.subr.mxu0 0.0
    %103 = vmatpush2.msra.mxu0 0.0
    %104 = vmatprep.subr.mxu0 0.0
    %105 = vmatpush2.msra.mxu0 0.0
    %106 = vmatprep.subr.mxu0 0.0
    %107 = vmatpush2.msra.mxu0 0.0
    %108 = vmatprep.subr.mxu0 0.0
    %109 = vmatpush2.msra.mxu0 0.0
    %110 = vmatprep.mubr.f32.mxu0 0.0
    %111 = vmatmul.mubr.f32.gmra.mxu0 %v44
    %v112 = vpop.f32.mrf.mxu0
    %v113 = vadd.f32 %v35, %v112
    %v114 = vpop.f32.mrf.mxu0
    %v115 = vadd.f32 %v39, %v114
    %116 = vdwg.mxu0
    %v117 = vmax.f32 %v113, 0.0
    %v118 = vmax.f32 %v115, 0.0
    %v119 = vld [vmem:[%s3] sm:$0xff]
    %v120 = vld [vmem:[%s3 + $0x8] sm:$0xff]
    %v121 = vld [vmem:[%s3 + $0x10] sm:$0xff]
    %v122 = vld [vmem:[%s3 + $0x18] sm:$0xff]
    %v123 = vld [vmem:[%s3 + $0x20] sm:$0xff]
    %v124 = vld [vmem:[%s3 + $0x28] sm:$0xff]
    %v125 = vld [vmem:[%s3 + $0x30] sm:$0xff]
    %v126 = vld [vmem:[%s3 + $0x38] sm:$0xff]
    %v127 = vld [vmem:[%s3 + $0x40] sm:$0xff]
    %v128 = vld [vmem:[%s3 + $0x48] sm:$0xff]
    %v129 = vld [vmem:[%s3 + $0x50] sm:$0xff]
    %v130 = vld [vmem:[%s3 + $0x58] sm:$0xff]
    %v131 = vld [vmem:[%s3 + $0x60] sm:$0xff]
    %v132 = vld [vmem:[%s3 + $0x68] sm:$0xff]
    %v133 = vld [vmem:[%s3 + $0x70] sm:$0xff]
    %v134 = vld [vmem:[%s3 + $0x78] sm:$0xff]
    %v135 = vld [vmem:[%s3 + $0x80] sm:$0xff]
    %v136 = vld [vmem:[%s3 + $0x88] sm:$0xff]
    %v137 = vld [vmem:[%s3 + $0x90] sm:$0xff]
    %v138 = vld [vmem:[%s3 + $0x98] sm:$0xff]
    %v139 = vld [vmem:[%s3 + $0xa0] sm:$0xff]
    %v140 = vld [vmem:[%s3 + $0xa8] sm:$0xff]
    %v141 = vld [vmem:[%s3 + $0xb0] sm:$0xff]
    %v142 = vld [vmem:[%s3 + $0xb8] sm:$0xff]
    %v143 = vld [vmem:[%s4] sm:$0x1]
    %v145 = vlaneseq
    %v146 = vshrl.u32 %v145, 7
    %v147 = vsub.s32 0, %v146
    %v148 = vrot.slane %v143, %v147
    %vm150 = vcmask 523264
    %v152 = vsel %vm150, %v118, 0
    %154 = vmatprep.subr.mxu0 0.0
    %155 = vmatpush1.msra.mxu0 %v134
    %156 = vmatprep.subr.mxu0 0.0
    %157 = vmatpush1.msra.mxu0 %v133
    %158 = vmatprep.subr.mxu0 0.0
    %159 = vmatpush1.msra.mxu0 %v132
    %160 = vmatprep.subr.mxu0 0.0
    %161 = vmatpush1.msra.mxu0 %v131
    %162 = vmatprep.subr.mxu0 0.0
    %163 = vmatpush1.msra.mxu0 %v130
    %164 = vmatprep.subr.mxu0 0.0
    %165 = vmatpush1.msra.mxu0 %v129
    %166 = vmatprep.subr.mxu0 0.0
    %167 = vmatpush1.msra.mxu0 %v128
    %168 = vmatprep.subr.mxu0 0.0
    %169 = vmatpush1.msra.mxu0 %v127
    %170 = vmatprep.subr.mxu0 0.0
    %171 = vmatpush1.msra.mxu0 %v126
    %172 = vmatprep.subr.mxu0 0.0
    %173 = vmatpush1.msra.mxu0 %v125
    %174 = vmatprep.subr.mxu0 0.0
    %175 = vmatpush1.msra.mxu0 %v124
    %176 = vmatprep.subr.mxu0 0.0
    %177 = vmatpush1.msra.mxu0 %v123
    %178 = vmatprep.subr.mxu0 0.0
    %179 = vmatpush1.msra.mxu0 %v122
    %180 = vmatprep.subr.mxu0 0.0
    %181 = vmatpush1.msra.mxu0 %v121
    %182 = vmatprep.subr.mxu0 0.0
    %183 = vmatpush1.msra.mxu0 %v120
    %184 = vmatprep.subr.mxu0 0.0
    %185 = vmatpush1.msra.mxu0 %v119
    %186 = vmatprep.subr.mxu0 0.0
    %187 = vmatpush2.msra.mxu0 0.0
    %188 = vmatprep.subr.mxu0 0.0
    %189 = vmatpush2.msra.mxu0 0.0
    %190 = vmatprep.subr.mxu0 0.0
    %191 = vmatpush2.msra.mxu0 0.0
    %192 = vmatprep.subr.mxu0 0.0
    %193 = vmatpush2.msra.mxu0 0.0
    %194 = vmatprep.subr.mxu0 0.0
    %195 = vmatpush2.msra.mxu0 0.0
    %196 = vmatprep.subr.mxu0 0.0
    %197 = vmatpush2.msra.mxu0 0.0
    %198 = vmatprep.subr.mxu0 0.0
    %199 = vmatpush2.msra.mxu0 0.0
    %200 = vmatprep.subr.mxu0 0.0
    %201 = vmatpush2.msra.mxu0 0.0
    %202 = vmatprep.subr.mxu0 0.0
    %203 = vmatpush2.msra.mxu0 %v142
    %204 = vmatprep.subr.mxu0 0.0
    %205 = vmatpush2.msra.mxu0 %v141
    %206 = vmatprep.subr.mxu0 0.0
    %207 = vmatpush2.msra.mxu0 %v140
    %208 = vmatprep.subr.mxu0 0.0
    %209 = vmatpush2.msra.mxu0 %v139
    %210 = vmatprep.subr.mxu0 0.0
    %211 = vmatpush2.msra.mxu0 %v138
    %212 = vmatprep.subr.mxu0 0.0
    %213 = vmatpush2.msra.mxu0 %v137
    %214 = vmatprep.subr.mxu0 0.0
    %215 = vmatpush2.msra.mxu0 %v136
    %216 = vmatprep.subr.mxu0 0.0
    %217 = vmatpush2.msra.mxu0 %v135
    %218 = vmatprep.mubr.f32.mxu0 %v152
    %219 = vmatmul.mubr.f32.gmra.mxu0 %v117
    %v220 = vpop.f32.mrf.mxu0
    %v221 = vadd.f32 %v148, %v220
    %v222 = vpop.f32.mrf.mxu0
    %223 = vdwg.mxu0
    %vm224 = vcmask 392192
    %225 = vst.msk [vmem:[#allocation2] sm:$0xff] %vm224, %v221
    // Predicated region
    $region22: #{multi_network_forward.1} parent=1 // pred_check
      _
    $region23: #{multi_network_forward.1} parent=1 // pred_check_branch
      %227 = sbr.rel (0) target = $region25
    $region24: #{multi_network_forward.1} parent=1 // pred_region
      %s229 = ssub.s32 128, 128
      %230 = vsyncadd [#allocation3], %s229
      %s232 = sshll.u32 [#allocation2], 4
      %s233 = int_to_ptr.vmem [resolvable:$true] %s232
      %235 = dma.vmem_to_hbm [thread:$0]  %s233, 128, %s5, [#allocation3]
    $region25: #{multi_network_forward.1} parent=1 // pred_fallthru
      _
    // Predicated region
    $region26: #{multi_network_forward.1} parent=1 // pred_check
      _
    $region27: #{multi_network_forward.1} parent=1 // pred_check_branch
      %237 = sbr.rel (0) target = $region29
    $region28: #{multi_network_forward.1} parent=1 // pred_region
      %238 = dma.done [#allocation3], 128
    $region29: #{multi_network_forward.1} parent=1 // pred_fallthru
      _
    %239 = vsyncpa [#allocation3], 1

</llo_original>
